<compile_context>
chip_gen: v5e
topology: v5e:2x2
jax: 0.10.0
libtpu: 0.0.40
codegen_flags: <defaults>
</compile_context>

<pallas_src>
import functools
import math

import jax
import jax.numpy as jnp
from jax.experimental import pallas as pl


# ----------------------------------------------------------------------------
# Fused Pallas kernel: the whole MLP in one invocation.
# refs = (x_ref, w0, b0, w1, b1, ..., w_{L-1}, b_{L-1}, o_ref)
# ----------------------------------------------------------------------------
def fused_mlp_kernel(*refs, n_layers):
    x_ref = refs[0]
    o_ref = refs[-1]
    h = x_ref[...].astype(jnp.float32)
    for i in range(n_layers):
        w = refs[1 + 2 * i][...]                      # (Din, Dout) bf16, scale pre-folded
        b = refs[2 + 2 * i][...]                      # (1, Dout)   f32
        # bf16 x bf16 MXU matmul with f32 accumulation.
        h = jnp.dot(h.astype(jnp.bfloat16), w,
                    preferred_element_type=jnp.float32) + b
        if i != n_layers - 1:
            h = jnp.maximum(h, 0.0)                   # activation ("relu") on hidden layers only
    o_ref[...] = h.astype(o_ref.dtype)                # single (B, Dout) HBM store


# ----------------------------------------------------------------------------
# Parameters: raw (PyTorch-Linear-like) init + host-side packing
# (scale folding in f32, then bf16 cast; NO lane padding).
# ----------------------------------------------------------------------------
def init_raw_params(layers_dim, key):
    """Per layer: 'scale' (Din,), 'w' (Din,Dout), 'b' (Dout,)."""
    params = []
    for d_in, d_out in zip(layers_dim[:-1], layers_dim[1:]):
        key, kw, kb = jax.random.split(key, 3)
        bound = 1.0 / math.sqrt(d_in)
        w = jax.random.uniform(kw, (d_in, d_out), jnp.float32, -bound, bound)
        b = jax.random.uniform(kb, (d_out,), jnp.float32, -bound, bound)
        scale = jnp.full((d_in,), 1.0 / math.sqrt(d_in), jnp.float32)
        params.append({"scale": scale, "w": w, "b": b})
    return params


def pack_params(raw_params):
    """Fold PreAct scale into W (f32), cast W to bf16, keep native shapes."""
    ws, bs = [], []
    for p in raw_params:
        w = (p["w"] * p["scale"][:, None]).astype(jnp.bfloat16)   # (x*s)@W == x@(diag(s)W)
        b = p["b"].reshape(1, -1).astype(jnp.float32)
        ws.append(w)
        bs.append(b)
    return {"w": ws, "b": bs, "dout": raw_params[-1]["w"].shape[1]}


# ----------------------------------------------------------------------------
# Forward pass matching MLP_scaled.forward:
#   x = x.flatten(start_dim=1)
#   hidden layers: PreAct -> Linear -> activation
#   final layer:   PreAct -> Linear (no activation)
# ----------------------------------------------------------------------------
def mlp_scaled_forward(x, packed):
    B = x.shape[0]
    x = x.reshape(B, -1).astype(jnp.float32)          # flatten(start_dim=1)

    weights, biases = packed["w"], packed["b"]
    n_layers = len(weights)
    dout = packed["dout"]

    # Everything fits trivially in VMEM (~0.1 MiB here), so each operand is a
    # single full-array block; no grid needed.
    flat_inputs = [x]
    in_specs = [pl.BlockSpec(x.shape, lambda: (0, 0))]
    flops = 0
    bytes_accessed = x.size * 4 + B * dout * 4
    for w, b in zip(weights, biases):
        flat_inputs += [w, b]
        in_specs += [
            pl.BlockSpec(w.shape, lambda: (0, 0)),
            pl.BlockSpec(b.shape, lambda: (0, 0)),
        ]
        flops += 2 * B * w.shape[0] * w.shape[1]
        bytes_accessed += w.size * 2 + b.size * 4     # bf16 weights, f32 biases

    kernel = functools.partial(fused_mlp_kernel, n_layers=n_layers)
    out = pl.pallas_call(
        kernel,
        out_shape=jax.ShapeDtypeStruct((B, dout), jnp.float32),
        in_specs=in_specs,
        out_specs=pl.BlockSpec((B, dout), lambda: (0, 0)),
        cost_estimate=pl.CostEstimate(
            flops=flops, transcendentals=0, bytes_accessed=bytes_accessed
        ),
    )(*flat_inputs)
    return out


if __name__ == "__main__":
    key = jax.random.PRNGKey(0)
    kx, kp = jax.random.split(key)

    # Small example consistent with the module: image-like input flattened to a vector.
    x = jax.random.normal(kx, (2, 4, 16, 16), dtype=jnp.float32)   # B=2, C=4, H=W=16
    flat_dim = 4 * 16 * 16                                          # 1024
    layers_dim = [flat_dim, 32, 32, 8]                              # hidden dims + output

    raw_params = init_raw_params(layers_dim, kp)
    packed = pack_params(raw_params)

    out = mlp_scaled_forward(x, packed)
    jax.block_until_ready(out)
    assert out.shape == (2, layers_dim[-1])

    # Reference 1: same quantization as the kernel (bf16 weights / bf16 inputs to
    # each dot, f32 accumulate) in pure JAX -> verifies kernel mechanics tightly.
    hq = x.reshape(2, -1).astype(jnp.float32)
    for i in range(len(packed["w"])):
        hq = jnp.dot(hq.astype(jnp.bfloat16), packed["w"][i],
                     preferred_element_type=jnp.float32) + packed["b"][i]
        if i != len(packed["w"]) - 1:
            hq = jnp.maximum(hq, 0.0)
    assert jnp.allclose(out, hq, atol=1e-3, rtol=1e-3)

    # Reference 2: full-precision f32 module math on the UNFOLDED raw params
    # (looser tolerance accounts for the bf16 weight quantization).
    xr = x.reshape(2, -1)
    for i, p in enumerate(raw_params):
        xr = (xr * p["scale"]) @ p["w"] + p["b"]
        if i != len(raw_params) - 1:
            xr = jnp.maximum(xr, 0.0)
    assert jnp.allclose(out, xr, atol=5e-3, rtol=5e-2)

    print("KERNEL_OK")
</pallas_src>

<mosaic_0001>
module attributes {stable_mosaic.version = 11 : i64} {
  func.func @fused_mlp_kernel(%arg0: memref<2x1024xf32, #tpu.memory_space<vmem>>, %arg1: memref<1024x32xbf16, #tpu.memory_space<vmem>>, %arg2: memref<1x32xf32, #tpu.memory_space<vmem>>, %arg3: memref<32x32xbf16, #tpu.memory_space<vmem>>, %arg4: memref<1x32xf32, #tpu.memory_space<vmem>>, %arg5: memref<32x8xbf16, #tpu.memory_space<vmem>>, %arg6: memref<1x8xf32, #tpu.memory_space<vmem>>, %arg7: memref<2x8xf32, #tpu.memory_space<vmem>>) attributes {dimension_semantics = [], scalar_prefetch = 0 : i64, scratch_operands = 0 : i64, tpu.core_type = #tpu.core_type<tc>} {
    %c0 = arith.constant 0 : index
    %c0_0 = arith.constant 0 : index
    %0 = vector.load %arg0[%c0, %c0_0] : memref<2x1024xf32, #tpu.memory_space<vmem>>, vector<2x1024xf32>
    %c0_1 = arith.constant 0 : index
    %c0_2 = arith.constant 0 : index
    %1 = vector.load %arg1[%c0_1, %c0_2] : memref<1024x32xbf16, #tpu.memory_space<vmem>>, vector<1024x32xbf16>
    %c0_3 = arith.constant 0 : index
    %c0_4 = arith.constant 0 : index
    %2 = vector.load %arg2[%c0_3, %c0_4] : memref<1x32xf32, #tpu.memory_space<vmem>>, vector<1x32xf32>
    %3 = arith.truncf %0 : vector<2x1024xf32> to vector<2x1024xbf16>
    %cst = arith.constant dense<0.000000e+00> : vector<2x32xf32>
    %4 = tpu.matmul %3, %1, %cst {dimension_numbers = #tpu.dot_dimension_numbers<[1], [0], [0], [1], [0, 0, 1, 1], [], []>} : vector<2x1024xbf16>, vector<1024x32xbf16>, vector<2x32xf32> -> vector<2x32xf32>
    %5 = vector.broadcast %2 : vector<1x32xf32> to vector<2x32xf32>
    %6 = arith.addf %4, %5 : vector<2x32xf32>
    %cst_5 = arith.constant 0.000000e+00 : f32
    %7 = vector.broadcast %cst_5 : f32 to vector<2x32xf32>
    %8 = arith.maximumf %6, %7 : vector<2x32xf32>
    %c0_6 = arith.constant 0 : index
    %c0_7 = arith.constant 0 : index
    %9 = vector.load %arg3[%c0_6, %c0_7] : memref<32x32xbf16, #tpu.memory_space<vmem>>, vector<32x32xbf16>
    %c0_8 = arith.constant 0 : index
    %c0_9 = arith.constant 0 : index
    %10 = vector.load %arg4[%c0_8, %c0_9] : memref<1x32xf32, #tpu.memory_space<vmem>>, vector<1x32xf32>
    %11 = arith.truncf %8 : vector<2x32xf32> to vector<2x32xbf16>
    %cst_10 = arith.constant dense<0.000000e+00> : vector<2x32xf32>
    %12 = tpu.matmul %11, %9, %cst_10 {dimension_numbers = #tpu.dot_dimension_numbers<[1], [0], [0], [1], [0, 0, 1, 1], [], []>} : vector<2x32xbf16>, vector<32x32xbf16>, vector<2x32xf32> -> vector<2x32xf32>
    %13 = vector.broadcast %10 : vector<1x32xf32> to vector<2x32xf32>
    %14 = arith.addf %12, %13 : vector<2x32xf32>
    %cst_11 = arith.constant 0.000000e+00 : f32
    %15 = vector.broadcast %cst_11 : f32 to vector<2x32xf32>
    %16 = arith.maximumf %14, %15 : vector<2x32xf32>
    %c0_12 = arith.constant 0 : index
    %c0_13 = arith.constant 0 : index
    %17 = vector.load %arg5[%c0_12, %c0_13] : memref<32x8xbf16, #tpu.memory_space<vmem>>, vector<32x8xbf16>
    %c0_14 = arith.constant 0 : index
    %c0_15 = arith.constant 0 : index
    %18 = vector.load %arg6[%c0_14, %c0_15] : memref<1x8xf32, #tpu.memory_space<vmem>>, vector<1x8xf32>
    %19 = arith.truncf %16 : vector<2x32xf32> to vector<2x32xbf16>
    %cst_16 = arith.constant dense<0.000000e+00> : vector<2x8xf32>
    %20 = tpu.matmul %19, %17, %cst_16 {dimension_numbers = #tpu.dot_dimension_numbers<[1], [0], [0], [1], [0, 0, 1, 1], [], []>} : vector<2x32xbf16>, vector<32x8xbf16>, vector<2x8xf32> -> vector<2x8xf32>
    %21 = vector.broadcast %18 : vector<1x8xf32> to vector<2x8xf32>
    %22 = arith.addf %20, %21 : vector<2x8xf32>
    %c0_17 = arith.constant 0 : index
    %c0_18 = arith.constant 0 : index
    %23 = vector.load %arg7[%c0_17, %c0_18] : memref<2x8xf32, #tpu.memory_space<vmem>>, vector<2x8xf32>
    tpu.vector_store %arg7[%c0_17, %c0_18], %22 {strides = array<i32>} : memref<2x8xf32, #tpu.memory_space<vmem>>, vector<2x8xf32>,
    return
  }
}

</mosaic_0001>

<llo_original>
// kernel: tpu_custom_call.1
$region0: #{tpu_custom_call.1}
  #allocation0 [shape = 'u32[]', space=smem, size = 0x4, offset = 0x4, fixed_abs, tag = 'smem constant byte address 0x4 - core index']
  #allocation1 [shape = 'u32[72,128]{1,0:T(1,128)}', space=vmem, size = 0x9000, scoped, tag = 'internal scratch']
  %s0 = inlined_call_operand.vmem [shape: f32[2,1024], index: 0, kind: input, shape index: {}]
  %s1 = inlined_call_operand.vmem [shape: bf16[1024,32], index: 1, kind: input, shape index: {}]
  %s2 = inlined_call_operand.vmem [shape: f32[1,32], index: 2, kind: input, shape index: {}]
  %s3 = inlined_call_operand.vmem [shape: bf16[32,32], index: 3, kind: input, shape index: {}]
  %s4 = inlined_call_operand.vmem [shape: f32[1,32], index: 4, kind: input, shape index: {}]
  %s5 = inlined_call_operand.vmem [shape: bf16[32,8], index: 5, kind: input, shape index: {}]
  %s6 = inlined_call_operand.vmem [shape: f32[1,8], index: 6, kind: input, shape index: {}]
  %s7 = inlined_call_operand.hbm [shape: f32[2,8], index: 7, kind: output, shape index: {}]
  %s8 = sld [smem:[#allocation0]]
  $region38: #{tpu_custom_call.1} parent=0
    _
  %s10 = ssub.s32 1, %s8
  %s11 = scalar_select 0, %s10, %s8
  $region1: #{tpu_custom_call.1} parent=0
    #allocation2 [shape = 'u8[1024]{0}', space=vmem, size = 0x400, scoped, tag = 'output window, operand 0, single buffered']
    #allocation3 [shape = 's32[1]{0}', space=sflag, size = 0x4, scoped, tag = 'scoped memory for tpu_custom_call.1']
    %12 = vsyncpa [#allocation3], 0
    // Predicated region
    $region2: #{tpu_custom_call.1} parent=1 // pred_check
      _
    $region3: #{tpu_custom_call.1} parent=1 // pred_check_branch
      %14 = sbr.rel (0) target = $region5
    $region4: #{tpu_custom_call.1} parent=1 // pred_region
      _
    $region5: #{tpu_custom_call.1} parent=1 // pred_fallthru
      _
    // Predicated region
    $region6: #{tpu_custom_call.1} parent=1 // pred_check
      _
    $region7: #{tpu_custom_call.1} parent=1 // pred_check_branch
      %16 = sbr.rel (0) target = $region9
    $region8: #{tpu_custom_call.1} parent=1 // pred_region
      _
    $region9: #{tpu_custom_call.1} parent=1 // pred_fallthru
      _
    // Predicated region
    $region10: #{tpu_custom_call.1} parent=1 // pred_check
      _
    $region11: #{tpu_custom_call.1} parent=1 // pred_check_branch
      %18 = sbr.rel (0) target = $region13
    $region12: #{tpu_custom_call.1} parent=1 // pred_region
      _
    $region13: #{tpu_custom_call.1} parent=1 // pred_fallthru
      _
    // Predicated region
    $region14: #{tpu_custom_call.1} parent=1 // pred_check
      _
    $region15: #{tpu_custom_call.1} parent=1 // pred_check_branch
      %20 = sbr.rel (0) target = $region17
    $region16: #{tpu_custom_call.1} parent=1 // pred_region
      _
    $region17: #{tpu_custom_call.1} parent=1 // pred_fallthru
      _
    // Predicated region
    $region18: #{tpu_custom_call.1} parent=1 // pred_check
      _
    $region19: #{tpu_custom_call.1} parent=1 // pred_check_branch
      %22 = sbr.rel (0) target = $region21
    $region20: #{tpu_custom_call.1} parent=1 // pred_region
      _
    $region21: #{tpu_custom_call.1} parent=1 // pred_fallthru
      _
    // Predicated region
    $region22: #{tpu_custom_call.1} parent=1 // pred_check
      _
    $region23: #{tpu_custom_call.1} parent=1 // pred_check_branch
      %24 = sbr.rel (0) target = $region25
    $region24: #{tpu_custom_call.1} parent=1 // pred_region
      _
    $region25: #{tpu_custom_call.1} parent=1 // pred_fallthru
      _
    // Predicated region
    $region26: #{tpu_custom_call.1} parent=1 // pred_check
      _
    $region27: #{tpu_custom_call.1} parent=1 // pred_check_branch
      %26 = sbr.rel (0) target = $region29
    $region28: #{tpu_custom_call.1} parent=1 // pred_region
      _
    $region29: #{tpu_custom_call.1} parent=1 // pred_fallthru
      _
    %v28 = vld [vmem:[%s0] sm:$0xff]
    %v29 = vld [vmem:[%s0 + $0x8] sm:$0xff]
    %v30 = vld [vmem:[%s1] sm:$0xf]
    %v31 = vld [vmem:[%s1 + $0x4] sm:$0xf]
    %v32 = vld [vmem:[%s1 + $0x8] sm:$0xf]
    %v33 = vld [vmem:[%s1 + $0xc] sm:$0xf]
    %v34 = vld [vmem:[%s1 + $0x10] sm:$0xf]
    %v35 = vld [vmem:[%s1 + $0x14] sm:$0xf]
    %v36 = vld [vmem:[%s1 + $0x18] sm:$0xf]
    %v37 = vld [vmem:[%s1 + $0x1c] sm:$0xf]
    %v38 = vld [vmem:[%s1 + $0x20] sm:$0xf]
    %v39 = vld [vmem:[%s1 + $0x24] sm:$0xf]
    %v40 = vld [vmem:[%s1 + $0x28] sm:$0xf]
    %v41 = vld [vmem:[%s1 + $0x2c] sm:$0xf]
    %v42 = vld [vmem:[%s1 + $0x30] sm:$0xf]
    %v43 = vld [vmem:[%s1 + $0x34] sm:$0xf]
    %v44 = vld [vmem:[%s1 + $0x38] sm:$0xf]
    %v45 = vld [vmem:[%s1 + $0x3c] sm:$0xf]
    %v46 = vld [vmem:[%s1 + $0x40] sm:$0xf]
    %v47 = vld [vmem:[%s1 + $0x44] sm:$0xf]
    %v48 = vld [vmem:[%s1 + $0x48] sm:$0xf]
    %v49 = vld [vmem:[%s1 + $0x4c] sm:$0xf]
    %v50 = vld [vmem:[%s1 + $0x50] sm:$0xf]
    %v51 = vld [vmem:[%s1 + $0x54] sm:$0xf]
    %v52 = vld [vmem:[%s1 + $0x58] sm:$0xf]
    %v53 = vld [vmem:[%s1 + $0x5c] sm:$0xf]
    %v54 = vld [vmem:[%s1 + $0x60] sm:$0xf]
    %v55 = vld [vmem:[%s1 + $0x64] sm:$0xf]
    %v56 = vld [vmem:[%s1 + $0x68] sm:$0xf]
    %v57 = vld [vmem:[%s1 + $0x6c] sm:$0xf]
    %v58 = vld [vmem:[%s1 + $0x70] sm:$0xf]
    %v59 = vld [vmem:[%s1 + $0x74] sm:$0xf]
    %v60 = vld [vmem:[%s1 + $0x78] sm:$0xf]
    %v61 = vld [vmem:[%s1 + $0x7c] sm:$0xf]
    %v62 = vld [vmem:[%s1 + $0x80] sm:$0xf]
    %v63 = vld [vmem:[%s1 + $0x84] sm:$0xf]
    %v64 = vld [vmem:[%s1 + $0x88] sm:$0xf]
    %v65 = vld [vmem:[%s1 + $0x8c] sm:$0xf]
    %v66 = vld [vmem:[%s1 + $0x90] sm:$0xf]
    %v67 = vld [vmem:[%s1 + $0x94] sm:$0xf]
    %v68 = vld [vmem:[%s1 + $0x98] sm:$0xf]
    %v69 = vld [vmem:[%s1 + $0x9c] sm:$0xf]
    %v70 = vld [vmem:[%s1 + $0xa0] sm:$0xf]
    %v71 = vld [vmem:[%s1 + $0xa4] sm:$0xf]
    %v72 = vld [vmem:[%s1 + $0xa8] sm:$0xf]
    %v73 = vld [vmem:[%s1 + $0xac] sm:$0xf]
    %v74 = vld [vmem:[%s1 + $0xb0] sm:$0xf]
    %v75 = vld [vmem:[%s1 + $0xb4] sm:$0xf]
    %v76 = vld [vmem:[%s1 + $0xb8] sm:$0xf]
    %v77 = vld [vmem:[%s1 + $0xbc] sm:$0xf]
    %v78 = vld [vmem:[%s1 + $0xc0] sm:$0xf]
    %v79 = vld [vmem:[%s1 + $0xc4] sm:$0xf]
    %v80 = vld [vmem:[%s1 + $0xc8] sm:$0xf]
    %v81 = vld [vmem:[%s1 + $0xcc] sm:$0xf]
    %v82 = vld [vmem:[%s1 + $0xd0] sm:$0xf]
    %v83 = vld [vmem:[%s1 + $0xd4] sm:$0xf]
    %v84 = vld [vmem:[%s1 + $0xd8] sm:$0xf]
    %v85 = vld [vmem:[%s1 + $0xdc] sm:$0xf]
    %v86 = vld [vmem:[%s1 + $0xe0] sm:$0xf]
    %v87 = vld [vmem:[%s1 + $0xe4] sm:$0xf]
    %v88 = vld [vmem:[%s1 + $0xe8] sm:$0xf]
    %v89 = vld [vmem:[%s1 + $0xec] sm:$0xf]
    %v90 = vld [vmem:[%s1 + $0xf0] sm:$0xf]
    %v91 = vld [vmem:[%s1 + $0xf4] sm:$0xf]
    %v92 = vld [vmem:[%s1 + $0xf8] sm:$0xf]
    %v93 = vld [vmem:[%s1 + $0xfc] sm:$0xf]
    %v94 = vld [vmem:[%s1 + $0x100] sm:$0xf]
    %v95 = vld [vmem:[%s1 + $0x104] sm:$0xf]
    %v96 = vld [vmem:[%s1 + $0x108] sm:$0xf]
    %v97 = vld [vmem:[%s1 + $0x10c] sm:$0xf]
    %v98 = vld [vmem:[%s1 + $0x110] sm:$0xf]
    %v99 = vld [vmem:[%s1 + $0x114] sm:$0xf]
    %v100 = vld [vmem:[%s1 + $0x118] sm:$0xf]
    %v101 = vld [vmem:[%s1 + $0x11c] sm:$0xf]
    %v102 = vld [vmem:[%s1 + $0x120] sm:$0xf]
    %v103 = vld [vmem:[%s1 + $0x124] sm:$0xf]
    %v104 = vld [vmem:[%s1 + $0x128] sm:$0xf]
    %v105 = vld [vmem:[%s1 + $0x12c] sm:$0xf]
    %v106 = vld [vmem:[%s1 + $0x130] sm:$0xf]
    %v107 = vld [vmem:[%s1 + $0x134] sm:$0xf]
    %v108 = vld [vmem:[%s1 + $0x138] sm:$0xf]
    %v109 = vld [vmem:[%s1 + $0x13c] sm:$0xf]
    %v110 = vld [vmem:[%s1 + $0x140] sm:$0xf]
    %v111 = vld [vmem:[%s1 + $0x144] sm:$0xf]
    %v112 = vld [vmem:[%s1 + $0x148] sm:$0xf]
    %v113 = vld [vmem:[%s1 + $0x14c] sm:$0xf]
    %v114 = vld [vmem:[%s1 + $0x150] sm:$0xf]
    %v115 = vld [vmem:[%s1 + $0x154] sm:$0xf]
    %v116 = vld [vmem:[%s1 + $0x158] sm:$0xf]
    %v117 = vld [vmem:[%s1 + $0x15c] sm:$0xf]
    %v118 = vld [vmem:[%s1 + $0x160] sm:$0xf]
    %v119 = vld [vmem:[%s1 + $0x164] sm:$0xf]
    %v120 = vld [vmem:[%s1 + $0x168] sm:$0xf]
    %v121 = vld [vmem:[%s1 + $0x16c] sm:$0xf]
    %v122 = vld [vmem:[%s1 + $0x170] sm:$0xf]
    %v123 = vld [vmem:[%s1 + $0x174] sm:$0xf]
    %v124 = vld [vmem:[%s1 + $0x178] sm:$0xf]
    %v125 = vld [vmem:[%s1 + $0x17c] sm:$0xf]
    %v126 = vld [vmem:[%s1 + $0x180] sm:$0xf]
    %v127 = vld [vmem:[%s1 + $0x184] sm:$0xf]
    %v128 = vld [vmem:[%s1 + $0x188] sm:$0xf]
    %v129 = vld [vmem:[%s1 + $0x18c] sm:$0xf]
    %v130 = vld [vmem:[%s1 + $0x190] sm:$0xf]
    %v131 = vld [vmem:[%s1 + $0x194] sm:$0xf]
    %v132 = vld [vmem:[%s1 + $0x198] sm:$0xf]
    %v133 = vld [vmem:[%s1 + $0x19c] sm:$0xf]
    %v134 = vld [vmem:[%s1 + $0x1a0] sm:$0xf]
    %v135 = vld [vmem:[%s1 + $0x1a4] sm:$0xf]
    %v136 = vld [vmem:[%s1 + $0x1a8] sm:$0xf]
    %v137 = vld [vmem:[%s1 + $0x1ac] sm:$0xf]
    %v138 = vld [vmem:[%s1 + $0x1b0] sm:$0xf]
    %v139 = vld [vmem:[%s1 + $0x1b4] sm:$0xf]
    %v140 = vld [vmem:[%s1 + $0x1b8] sm:$0xf]
    %v141 = vld [vmem:[%s1 + $0x1bc] sm:$0xf]
    %v142 = vld [vmem:[%s1 + $0x1c0] sm:$0xf]
    %v143 = vld [vmem:[%s1 + $0x1c4] sm:$0xf]
    %v144 = vld [vmem:[%s1 + $0x1c8] sm:$0xf]
    %v145 = vld [vmem:[%s1 + $0x1cc] sm:$0xf]
    %v146 = vld [vmem:[%s1 + $0x1d0] sm:$0xf]
    %v147 = vld [vmem:[%s1 + $0x1d4] sm:$0xf]
    %v148 = vld [vmem:[%s1 + $0x1d8] sm:$0xf]
    %v149 = vld [vmem:[%s1 + $0x1dc] sm:$0xf]
    %v150 = vld [vmem:[%s1 + $0x1e0] sm:$0xf]
    %v151 = vld [vmem:[%s1 + $0x1e4] sm:$0xf]
    %v152 = vld [vmem:[%s1 + $0x1e8] sm:$0xf]
    %v153 = vld [vmem:[%s1 + $0x1ec] sm:$0xf]
    %v154 = vld [vmem:[%s1 + $0x1f0] sm:$0xf]
    %v155 = vld [vmem:[%s1 + $0x1f4] sm:$0xf]
    %v156 = vld [vmem:[%s1 + $0x1f8] sm:$0xf]
    %v157 = vld [vmem:[%s1 + $0x1fc] sm:$0xf]
    %v158 = vld [vmem:[%s2] sm:$0x1]
    %161 = vst [vmem:[#allocation1] ss:$4 sm:$0xff] %v28
    %s162 = scalar_lea.vmem [#allocation1], 32
    %163 = vst [vmem:[%s162] ss:$4 sm:$0xff] %v29
    %v164 = vld.sshfl [vmem:[#allocation1] sm:$0xff pattern:$0x73625140]
    %v165 = vld.sshfl [vmem:[#allocation1 + $0x8] sm:$0xff pattern:$0x73625140]
    %v166 = vld.sshfl [vmem:[#allocation1 + $0x10] sm:$0xff pattern:$0x73625140]
    %v167 = vld.sshfl [vmem:[#allocation1 + $0x18] sm:$0xff pattern:$0x73625140]
    %v168 = vld.sshfl [vmem:[#allocation1 + $0x20] sm:$0xff pattern:$0x73625140]
    %v169 = vld.sshfl [vmem:[#allocation1 + $0x28] sm:$0xff pattern:$0x73625140]
    %v170 = vld.sshfl [vmem:[#allocation1 + $0x30] sm:$0xff pattern:$0x73625140]
    %v171 = vld.sshfl [vmem:[#allocation1 + $0x38] sm:$0xff pattern:$0x73625140]
    %v180 = vpack.c.bf16 %v164, %v164
    %v181 = vpack.c.bf16 %v165, %v165
    %v182 = vpack.c.bf16 %v166, %v166
    %v183 = vpack.c.bf16 %v167, %v167
    %v184 = vpack.c.bf16 %v168, %v168
    %v185 = vpack.c.bf16 %v169, %v169
    %v186 = vpack.c.bf16 %v170, %v170
    %v187 = vpack.c.bf16 %v171, %v171
    %v189 = vperm.slane %v158, 0
    %v319 = vunpack.c.l.b16 %v30
    %v320 = vunpack.c.l.b16 %v31
    %v321 = vunpack.c.l.b16 %v32
    %v322 = vunpack.c.l.b16 %v33
    %v323 = vunpack.c.l.b16 %v34
    %v324 = vunpack.c.l.b16 %v35
    %v325 = vunpack.c.l.b16 %v36
    %v326 = vunpack.c.l.b16 %v37
    %v327 = vunpack.c.l.b16 %v38
    %v328 = vunpack.c.l.b16 %v39
    %v329 = vunpack.c.l.b16 %v40
    %v330 = vunpack.c.l.b16 %v41
    %v331 = vunpack.c.l.b16 %v42
    %v332 = vunpack.c.l.b16 %v43
    %v333 = vunpack.c.l.b16 %v44
    %v334 = vunpack.c.l.b16 %v45
    %v335 = vunpack.c.l.b16 %v46
    %v336 = vunpack.c.l.b16 %v47
    %v337 = vunpack.c.l.b16 %v48
    %v338 = vunpack.c.l.b16 %v49
    %v339 = vunpack.c.l.b16 %v50
    %v340 = vunpack.c.l.b16 %v51
    %v341 = vunpack.c.l.b16 %v52
    %v342 = vunpack.c.l.b16 %v53
    %v343 = vunpack.c.l.b16 %v54
    %v344 = vunpack.c.l.b16 %v55
    %v345 = vunpack.c.l.b16 %v56
    %v346 = vunpack.c.l.b16 %v57
    %v347 = vunpack.c.l.b16 %v58
    %v348 = vunpack.c.l.b16 %v59
    %v349 = vunpack.c.l.b16 %v60
    %v350 = vunpack.c.l.b16 %v61
    %v351 = vunpack.c.l.b16 %v62
    %v352 = vunpack.c.l.b16 %v63
    %v353 = vunpack.c.l.b16 %v64
    %v354 = vunpack.c.l.b16 %v65
    %v355 = vunpack.c.l.b16 %v66
    %v356 = vunpack.c.l.b16 %v67
    %v357 = vunpack.c.l.b16 %v68
    %v358 = vunpack.c.l.b16 %v69
    %v359 = vunpack.c.l.b16 %v70
    %v360 = vunpack.c.l.b16 %v71
    %v361 = vunpack.c.l.b16 %v72
    %v362 = vunpack.c.l.b16 %v73
    %v363 = vunpack.c.l.b16 %v74
    %v364 = vunpack.c.l.b16 %v75
    %v365 = vunpack.c.l.b16 %v76
    %v366 = vunpack.c.l.b16 %v77
    %v367 = vunpack.c.l.b16 %v78
    %v368 = vunpack.c.l.b16 %v79
    %v369 = vunpack.c.l.b16 %v80
    %v370 = vunpack.c.l.b16 %v81
    %v371 = vunpack.c.l.b16 %v82
    %v372 = vunpack.c.l.b16 %v83
    %v373 = vunpack.c.l.b16 %v84
    %v374 = vunpack.c.l.b16 %v85
    %v375 = vunpack.c.l.b16 %v86
    %v376 = vunpack.c.l.b16 %v87
    %v377 = vunpack.c.l.b16 %v88
    %v378 = vunpack.c.l.b16 %v89
    %v379 = vunpack.c.l.b16 %v90
    %v380 = vunpack.c.l.b16 %v91
    %v381 = vunpack.c.l.b16 %v92
    %v382 = vunpack.c.l.b16 %v93
    %v383 = vunpack.c.l.b16 %v94
    %v384 = vunpack.c.l.b16 %v95
    %v385 = vunpack.c.l.b16 %v96
    %v386 = vunpack.c.l.b16 %v97
    %v387 = vunpack.c.l.b16 %v98
    %v388 = vunpack.c.l.b16 %v99
    %v389 = vunpack.c.l.b16 %v100
    %v390 = vunpack.c.l.b16 %v101
    %v391 = vunpack.c.l.b16 %v102
    %v392 = vunpack.c.l.b16 %v103
    %v393 = vunpack.c.l.b16 %v104
    %v394 = vunpack.c.l.b16 %v105
    %v395 = vunpack.c.l.b16 %v106
    %v396 = vunpack.c.l.b16 %v107
    %v397 = vunpack.c.l.b16 %v108
    %v398 = vunpack.c.l.b16 %v109
    %v399 = vunpack.c.l.b16 %v110
    %v400 = vunpack.c.l.b16 %v111
    %v401 = vunpack.c.l.b16 %v112
    %v402 = vunpack.c.l.b16 %v113
    %v403 = vunpack.c.l.b16 %v114
    %v404 = vunpack.c.l.b16 %v115
    %v405 = vunpack.c.l.b16 %v116
    %v406 = vunpack.c.l.b16 %v117
    %v407 = vunpack.c.l.b16 %v118
    %v408 = vunpack.c.l.b16 %v119
    %v409 = vunpack.c.l.b16 %v120
    %v410 = vunpack.c.l.b16 %v121
    %v411 = vunpack.c.l.b16 %v122
    %v412 = vunpack.c.l.b16 %v123
    %v413 = vunpack.c.l.b16 %v124
    %v414 = vunpack.c.l.b16 %v125
    %v415 = vunpack.c.l.b16 %v126
    %v416 = vunpack.c.l.b16 %v127
    %v417 = vunpack.c.l.b16 %v128
    %v418 = vunpack.c.l.b16 %v129
    %v419 = vunpack.c.l.b16 %v130
    %v420 = vunpack.c.l.b16 %v131
    %v421 = vunpack.c.l.b16 %v132
    %v422 = vunpack.c.l.b16 %v133
    %v423 = vunpack.c.l.b16 %v134
    %v424 = vunpack.c.l.b16 %v135
    %v425 = vunpack.c.l.b16 %v136
    %v426 = vunpack.c.l.b16 %v137
    %v427 = vunpack.c.l.b16 %v138
    %v428 = vunpack.c.l.b16 %v139
    %v429 = vunpack.c.l.b16 %v140
    %v430 = vunpack.c.l.b16 %v141
    %v431 = vunpack.c.l.b16 %v142
    %v432 = vunpack.c.l.b16 %v143
    %v433 = vunpack.c.l.b16 %v144
    %v434 = vunpack.c.l.b16 %v145
    %v435 = vunpack.c.l.b16 %v146
    %v436 = vunpack.c.l.b16 %v147
    %v437 = vunpack.c.l.b16 %v148
    %v438 = vunpack.c.l.b16 %v149
    %v439 = vunpack.c.l.b16 %v150
    %v440 = vunpack.c.l.b16 %v151
    %v441 = vunpack.c.l.b16 %v152
    %v442 = vunpack.c.l.b16 %v153
    %v443 = vunpack.c.l.b16 %v154
    %v444 = vunpack.c.l.b16 %v155
    %v445 = vunpack.c.l.b16 %v156
    %v446 = vunpack.c.l.b16 %v157
    %v447 = vpack.c.b16 %v320, %v319
    %v448 = vpack.c.b16 %v322, %v321
    %v449 = vpack.c.b16 %v324, %v323
    %v450 = vpack.c.b16 %v326, %v325
    %v451 = vpack.c.b16 %v328, %v327
    %v452 = vpack.c.b16 %v330, %v329
    %v453 = vpack.c.b16 %v332, %v331
    %v454 = vpack.c.b16 %v334, %v333
    %v455 = vpack.c.b16 %v336, %v335
    %v456 = vpack.c.b16 %v338, %v337
    %v457 = vpack.c.b16 %v340, %v339
    %v458 = vpack.c.b16 %v342, %v341
    %v459 = vpack.c.b16 %v344, %v343
    %v460 = vpack.c.b16 %v346, %v345
    %v461 = vpack.c.b16 %v348, %v347
    %v462 = vpack.c.b16 %v350, %v349
    %v463 = vpack.c.b16 %v352, %v351
    %v464 = vpack.c.b16 %v354, %v353
    %v465 = vpack.c.b16 %v356, %v355
    %v466 = vpack.c.b16 %v358, %v357
    %v467 = vpack.c.b16 %v360, %v359
    %v468 = vpack.c.b16 %v362, %v361
    %v469 = vpack.c.b16 %v364, %v363
    %v470 = vpack.c.b16 %v366, %v365
    %v471 = vpack.c.b16 %v368, %v367
    %v472 = vpack.c.b16 %v370, %v369
    %v473 = vpack.c.b16 %v372, %v371
    %v474 = vpack.c.b16 %v374, %v373
    %v475 = vpack.c.b16 %v376, %v375
    %v476 = vpack.c.b16 %v378, %v377
    %v477 = vpack.c.b16 %v380, %v379
    %v478 = vpack.c.b16 %v382, %v381
    %v479 = vpack.c.b16 %v384, %v383
    %v480 = vpack.c.b16 %v386, %v385
    %v481 = vpack.c.b16 %v388, %v387
    %v482 = vpack.c.b16 %v390, %v389
    %v483 = vpack.c.b16 %v392, %v391
    %v484 = vpack.c.b16 %v394, %v393
    %v485 = vpack.c.b16 %v396, %v395
    %v486 = vpack.c.b16 %v398, %v397
    %v487 = vpack.c.b16 %v400, %v399
    %v488 = vpack.c.b16 %v402, %v401
    %v489 = vpack.c.b16 %v404, %v403
    %v490 = vpack.c.b16 %v406, %v405
    %v491 = vpack.c.b16 %v408, %v407
    %v492 = vpack.c.b16 %v410, %v409
    %v493 = vpack.c.b16 %v412, %v411
    %v494 = vpack.c.b16 %v414, %v413
    %v495 = vpack.c.b16 %v416, %v415
    %v496 = vpack.c.b16 %v418, %v417
    %v497 = vpack.c.b16 %v420, %v419
    %v498 = vpack.c.b16 %v422, %v421
    %v499 = vpack.c.b16 %v424, %v423
    %v500 = vpack.c.b16 %v426, %v425
    %v501 = vpack.c.b16 %v428, %v427
    %v502 = vpack.c.b16 %v430, %v429
    %v503 = vpack.c.b16 %v432, %v431
    %v504 = vpack.c.b16 %v434, %v433
    %v505 = vpack.c.b16 %v436, %v435
    %v506 = vpack.c.b16 %v438, %v437
    %v507 = vpack.c.b16 %v440, %v439
    %v508 = vpack.c.b16 %v442, %v441
    %v509 = vpack.c.b16 %v444, %v443
    %v510 = vpack.c.b16 %v446, %v445
    %575 = vmatpush.bf16.msra.mxu0 %v454
    %576 = vmatpush.bf16.msra.mxu0 %v453
    %577 = vmatpush.bf16.msra.mxu0 %v452
    %578 = vmatpush.bf16.msra.mxu0 %v451
    %579 = vmatpush.bf16.msra.mxu0 %v450
    %580 = vmatpush.bf16.msra.mxu0 %v449
    %581 = vmatpush.bf16.msra.mxu0 %v448
    %582 = vmatpush.bf16.msra.mxu0 %v447
    %583 = vmatmul.bf16.gmra.mxu0 %v180
    %v584 = vpop.f32.mrf.mxu0
    %v585 = vadd.f32 %v189, %v584
    %v586 = vpop.f32.mrf.mxu0
    %587 = vdwg.mxu0
    %588 = vmatpush.bf16.msra.mxu0 %v462
    %589 = vmatpush.bf16.msra.mxu0 %v461
    %590 = vmatpush.bf16.msra.mxu0 %v460
    %591 = vmatpush.bf16.msra.mxu0 %v459
    %592 = vmatpush.bf16.msra.mxu0 %v458
    %593 = vmatpush.bf16.msra.mxu0 %v457
    %594 = vmatpush.bf16.msra.mxu0 %v456
    %595 = vmatpush.bf16.msra.mxu0 %v455
    %596 = vmatmul.bf16.gmra.mxu0 %v181
    %v597 = vpop.f32.mrf.mxu0
    %v598 = vadd.f32 %v585, %v597
    %v599 = vpop.f32.mrf.mxu0
    %600 = vdwg.mxu0
    %601 = vmatpush.bf16.msra.mxu0 %v470
    %602 = vmatpush.bf16.msra.mxu0 %v469
    %603 = vmatpush.bf16.msra.mxu0 %v468
    %604 = vmatpush.bf16.msra.mxu0 %v467
    %605 = vmatpush.bf16.msra.mxu0 %v466
    %606 = vmatpush.bf16.msra.mxu0 %v465
    %607 = vmatpush.bf16.msra.mxu0 %v464
    %608 = vmatpush.bf16.msra.mxu0 %v463
    %609 = vmatmul.bf16.gmra.mxu0 %v182
    %v610 = vpop.f32.mrf.mxu0
    %v611 = vadd.f32 %v598, %v610
    %v612 = vpop.f32.mrf.mxu0
    %613 = vdwg.mxu0
    %614 = vmatpush.bf16.msra.mxu0 %v478
    %615 = vmatpush.bf16.msra.mxu0 %v477
    %616 = vmatpush.bf16.msra.mxu0 %v476
    %617 = vmatpush.bf16.msra.mxu0 %v475
    %618 = vmatpush.bf16.msra.mxu0 %v474
    %619 = vmatpush.bf16.msra.mxu0 %v473
    %620 = vmatpush.bf16.msra.mxu0 %v472
    %621 = vmatpush.bf16.msra.mxu0 %v471
    %622 = vmatmul.bf16.gmra.mxu0 %v183
    %v623 = vpop.f32.mrf.mxu0
    %v624 = vadd.f32 %v611, %v623
    %v625 = vpop.f32.mrf.mxu0
    %626 = vdwg.mxu0
    %627 = vmatpush.bf16.msra.mxu0 %v486
    %628 = vmatpush.bf16.msra.mxu0 %v485
    %629 = vmatpush.bf16.msra.mxu0 %v484
    %630 = vmatpush.bf16.msra.mxu0 %v483
    %631 = vmatpush.bf16.msra.mxu0 %v482
    %632 = vmatpush.bf16.msra.mxu0 %v481
    %633 = vmatpush.bf16.msra.mxu0 %v480
    %634 = vmatpush.bf16.msra.mxu0 %v479
    %635 = vmatmul.bf16.gmra.mxu0 %v184
    %v636 = vpop.f32.mrf.mxu0
    %v637 = vadd.f32 %v624, %v636
    %v638 = vpop.f32.mrf.mxu0
    %639 = vdwg.mxu0
    %640 = vmatpush.bf16.msra.mxu0 %v494
    %641 = vmatpush.bf16.msra.mxu0 %v493
    %642 = vmatpush.bf16.msra.mxu0 %v492
    %643 = vmatpush.bf16.msra.mxu0 %v491
    %644 = vmatpush.bf16.msra.mxu0 %v490
    %645 = vmatpush.bf16.msra.mxu0 %v489
    %646 = vmatpush.bf16.msra.mxu0 %v488
    %647 = vmatpush.bf16.msra.mxu0 %v487
    %648 = vmatmul.bf16.gmra.mxu0 %v185
    %v649 = vpop.f32.mrf.mxu0
    %v650 = vadd.f32 %v637, %v649
    %v651 = vpop.f32.mrf.mxu0
    %652 = vdwg.mxu0
    %653 = vmatpush.bf16.msra.mxu0 %v502
    %654 = vmatpush.bf16.msra.mxu0 %v501
    %655 = vmatpush.bf16.msra.mxu0 %v500
    %656 = vmatpush.bf16.msra.mxu0 %v499
    %657 = vmatpush.bf16.msra.mxu0 %v498
    %658 = vmatpush.bf16.msra.mxu0 %v497
    %659 = vmatpush.bf16.msra.mxu0 %v496
    %660 = vmatpush.bf16.msra.mxu0 %v495
    %661 = vmatmul.bf16.gmra.mxu0 %v186
    %v662 = vpop.f32.mrf.mxu0
    %v663 = vadd.f32 %v650, %v662
    %v664 = vpop.f32.mrf.mxu0
    %665 = vdwg.mxu0
    %666 = vmatpush.bf16.msra.mxu0 %v510
    %667 = vmatpush.bf16.msra.mxu0 %v509
    %668 = vmatpush.bf16.msra.mxu0 %v508
    %669 = vmatpush.bf16.msra.mxu0 %v507
    %670 = vmatpush.bf16.msra.mxu0 %v506
    %671 = vmatpush.bf16.msra.mxu0 %v505
    %672 = vmatpush.bf16.msra.mxu0 %v504
    %673 = vmatpush.bf16.msra.mxu0 %v503
    %674 = vmatmul.bf16.gmra.mxu0 %v187
    %v675 = vpop.f32.mrf.mxu0
    %v676 = vadd.f32 %v663, %v675
    %v677 = vpop.f32.mrf.mxu0
    %678 = vdwg.mxu0
    %v679 = vmax.f32 %v676, 0.0
    %v680 = vld [vmem:[%s3] sm:$0xf]
    %v681 = vld [vmem:[%s3 + $0x4] sm:$0xf]
    %v682 = vld [vmem:[%s3 + $0x8] sm:$0xf]
    %v683 = vld [vmem:[%s3 + $0xc] sm:$0xf]
    %v684 = vld [vmem:[%s4] sm:$0x1]
    %v685 = vpack.c.bf16 %v679, %v679
    %v687 = vperm.slane %v684, 0
    %v693 = vunpack.c.l.b16 %v680
    %v694 = vunpack.c.l.b16 %v681
    %v695 = vunpack.c.l.b16 %v682
    %v696 = vunpack.c.l.b16 %v683
    %v697 = vpack.c.b16 %v694, %v693
    %v698 = vpack.c.b16 %v696, %v695
    %vm701 = vcmask 261120
    %v703 = vsel %vm701, %v685, 0
    %705 = vmatpush.bf16.msra.mxu0 0
    %706 = vmatpush.bf16.msra.mxu0 0
    %707 = vmatpush.bf16.msra.mxu0 0
    %708 = vmatpush.bf16.msra.mxu0 0
    %709 = vmatpush.bf16.msra.mxu0 0
    %710 = vmatpush.bf16.msra.mxu0 0
    %711 = vmatpush.bf16.msra.mxu0 %v698
    %712 = vmatpush.bf16.msra.mxu0 %v697
    %713 = vmatmul.bf16.gmra.mxu0 %v703
    %v714 = vpop.f32.mrf.mxu0
    %v715 = vadd.f32 %v687, %v714
    %v716 = vpop.f32.mrf.mxu0
    %717 = vdwg.mxu0
    %v718 = vmax.f32 %v715, 0.0
    %v719 = vld [vmem:[%s5] sm:$0xf]
    %v720 = vld [vmem:[%s5 + $0x4] sm:$0xf]
    %v721 = vld [vmem:[%s5 + $0x8] sm:$0xf]
    %v722 = vld [vmem:[%s5 + $0xc] sm:$0xf]
    %v723 = vld [vmem:[%s6] sm:$0x1]
    %v724 = vpack.c.bf16 %v718, %v718
    %v726 = vperm.slane %v723, 0
    %v732 = vunpack.c.l.b16 %v719
    %v733 = vunpack.c.l.b16 %v720
    %v734 = vunpack.c.l.b16 %v721
    %v735 = vunpack.c.l.b16 %v722
    %v736 = vpack.c.b16 %v733, %v732
    %v737 = vpack.c.b16 %v735, %v734
    %v741 = vsel %vm701, %v724, 0
    %743 = vmatpush.bf16.msra.mxu0 0
    %744 = vmatpush.bf16.msra.mxu0 0
    %745 = vmatpush.bf16.msra.mxu0 0
    %746 = vmatpush.bf16.msra.mxu0 0
    %747 = vmatpush.bf16.msra.mxu0 0
    %748 = vmatpush.bf16.msra.mxu0 0
    %749 = vmatpush.bf16.msra.mxu0 %v737
    %750 = vmatpush.bf16.msra.mxu0 %v736
    %751 = vmatmul.bf16.gmra.mxu0 %v741
    %v752 = vpop.f32.mrf.mxu0
    %v753 = vadd.f32 %v726, %v752
    %v754 = vpop.f32.mrf.mxu0
    %755 = vdwg.mxu0
    %vm756 = vcmask 58368
    %757 = vst.msk [vmem:[#allocation2] sm:$0x3] %vm756, %v753
    // Predicated region
    $region30: #{tpu_custom_call.1} parent=1 // pred_check
      _
    $region31: #{tpu_custom_call.1} parent=1 // pred_check_branch
      %759 = sbr.rel (0) target = $region33
    $region32: #{tpu_custom_call.1} parent=1 // pred_region
      %761 = vsyncadd [#allocation3], 0
      %s763 = sshll.u32 [#allocation2], 4
      %s764 = int_to_ptr.vmem [resolvable:$true] %s763
      %s765 = sshll.u32 %s7, 4
      %s766 = int_to_ptr.hbm [resolvable:$true] %s765
      %768 = dma.vmem_to_hbm [thread:$0]  %s764, 32, %s766, [#allocation3]
    $region33: #{tpu_custom_call.1} parent=1 // pred_fallthru
      _
    // Predicated region
    $region34: #{tpu_custom_call.1} parent=1 // pred_check
      _
    $region35: #{tpu_custom_call.1} parent=1 // pred_check_branch
      %770 = sbr.rel (0) target = $region37
    $region36: #{tpu_custom_call.1} parent=1 // pred_region
      %772 = dma.done [#allocation3], 32
    $region37: #{tpu_custom_call.1} parent=1 // pred_fallthru
      _
    %773 = vsyncpa [#allocation3], 1

</llo_original>
